<compile_context>
chip_gen: v7x
topology: tpu7x:2x2x1
jax: 0.10.0
libtpu: 0.0.40
codegen_flags: <defaults>
</compile_context>

<pallas_src>
import jax
import jax.numpy as jnp
from jax.experimental import pallas as pl
from jax.experimental.pallas import tpu as pltpu

HIDDEN = 128
DROP_P = 0.5
_KEEP_SCALE = 1.0 / (1.0 - DROP_P)  # = 2.0


def _dropout_keep_mask(shape, seed_u32, row0_u32):
    """Keep mask with P(keep)=0.5 for an (HIDDEN, TB) tile whose batch (lane)
    columns start at global batch index row0.  murmur3-style finalizer."""
    hid = jax.lax.broadcasted_iota(jnp.uint32, shape, 0)   # hidden index
    bat = jax.lax.broadcasted_iota(jnp.uint32, shape, 1)   # in-tile batch index
    z = (bat + row0_u32) * jnp.uint32(HIDDEN) + hid + seed_u32
    z = (z ^ (z >> 16)) * jnp.uint32(0x85EBCA6B)
    z = (z ^ (z >> 13)) * jnp.uint32(0xC2B2AE35)
    z = z ^ (z >> 16)
    return (z & jnp.uint32(0x80000000)) != jnp.uint32(0)


def _regression_kernel(seed_ref, xt_ref, w1t_ref, b1_ref, w2_ref, b2_ref, out_ref):
    tb = out_ref.shape[1]
    # layer_1: (HIDDEN, F) @ (F, TB) -> (HIDDEN, TB); bf16 MXU, f32 accumulate.
    h = jnp.dot(w1t_ref[...], xt_ref[...], preferred_element_type=jnp.float32)
    h = h + b1_ref[...]                      # (HIDDEN, 1) broadcast over lanes
    h = jnp.maximum(h, 0.0)                  # relu
    # dropout(p=0.5, training=True); survivors scaled by 1/(1-p) = 2
    row0 = jax.lax.convert_element_type(pl.program_id(0) * tb, jnp.uint32)
    seed = jax.lax.convert_element_type(seed_ref[0], jnp.uint32)
    keep = _dropout_keep_mask(h.shape, seed, row0)
    h = jnp.where(keep, h * _KEEP_SCALE, 0.0)
    # layer_out: VPU multiply + sublane reduce (avoids an N=1 MXU matmul)
    y = jnp.sum(h * w2_ref[...], axis=0, keepdims=True) + b2_ref[...]  # (1, TB)
    out_ref[...] = y.astype(out_ref.dtype)


def pytorch_regression_forward(x, w1, b1, w2, b2, seed, *, block_b=512):
    """x: (B, F) f32, w1: (F, 128), b1: (128,), w2: (128, 1), b2: (1,).
    Returns (B, 1) f32."""
    B, F = x.shape
    assert w1.shape == (F, HIDDEN) and w2.shape == (HIDDEN, 1)

    # Lane-dense batch layout + bf16 MXU inputs (layout plumbing outside kernel).
    x_t = x.T.astype(jnp.bfloat16)                    # (F, B)
    w1_t = w1.T.astype(jnp.bfloat16)                  # (HIDDEN, F), VMEM-resident
    b1c = b1.reshape(HIDDEN, 1).astype(jnp.float32)
    w2c = w2.reshape(HIDDEN, 1).astype(jnp.float32)
    b2c = b2.reshape(1, 1).astype(jnp.float32)
    seed_arr = jnp.asarray([seed], dtype=jnp.int32)

    # Batch tile: multiple of 128 lanes when possible, else one full-batch tile
    # (the (8,128) block constraint allows a full-extent dim for small demo B).
    tb = min(block_b, B)
    if tb % 128 != 0:
        tb = B
    grid = (pl.cdiv(B, tb),)

    grid_spec = pltpu.PrefetchScalarGridSpec(
        num_scalar_prefetch=1,
        grid=grid,
        in_specs=[
            pl.BlockSpec((F, tb), lambda i, s: (0, i)),       # x^T batch tile
            pl.BlockSpec((HIDDEN, F), lambda i, s: (0, 0)),   # W1^T (resident)
            pl.BlockSpec((HIDDEN, 1), lambda i, s: (0, 0)),   # b1
            pl.BlockSpec((HIDDEN, 1), lambda i, s: (0, 0)),   # w2
            pl.BlockSpec((1, 1), lambda i, s: (0, 0)),        # b2
        ],
        out_specs=pl.BlockSpec((1, tb), lambda i, s: (0, i)),  # lane-dense out
    )

    out_row = pl.pallas_call(
        _regression_kernel,
        out_shape=jax.ShapeDtypeStruct((1, B), jnp.float32),
        grid_spec=grid_spec,
        compiler_params=pltpu.CompilerParams(
            dimension_semantics=("parallel",),   # shard batch across TCs on v7x
        ),
    )(seed_arr, x_t, w1_t, b1c, w2c, b2c)

    return out_row.reshape(B, 1)


def _reference_forward(x, w1, b1, w2, b2, seed):
    """Pure-JAX reference with the same bf16 rounding and the same hash mask."""
    xb = x.astype(jnp.bfloat16).astype(jnp.float32)
    w1b = w1.astype(jnp.bfloat16).astype(jnp.float32)
    h = jnp.maximum(xb @ w1b + b1.reshape(1, HIDDEN), 0.0)
    B = x.shape[0]
    idx = (jnp.arange(B, dtype=jnp.uint32)[:, None] * jnp.uint32(HIDDEN)
           + jnp.arange(HIDDEN, dtype=jnp.uint32)[None, :])
    z = idx + jnp.uint32(seed)
    z = (z ^ (z >> 16)) * jnp.uint32(0x85EBCA6B)
    z = (z ^ (z >> 13)) * jnp.uint32(0xC2B2AE35)
    z = z ^ (z >> 16)
    keep = (z & jnp.uint32(0x80000000)) != jnp.uint32(0)
    h = jnp.where(keep, h * _KEEP_SCALE, 0.0)
    return h @ w2 + b2.reshape(1, 1)


if __name__ == "__main__":
    # Small shapes consistent with the module: batch=8, num_features=32.
    B, NUM_FEATURES = 8, 32
    key = jax.random.PRNGKey(0)
    kx, kw1, kb1, kw2, kb2 = jax.random.split(key, 5)

    x = jax.random.normal(kx, (B, NUM_FEATURES), dtype=jnp.float32)

    # Deterministic param init matching nn.Linear's U(-1/sqrt(fan_in), +1/sqrt(fan_in)).
    bound1 = 1.0 / jnp.sqrt(jnp.float32(NUM_FEATURES))
    w1 = jax.random.uniform(kw1, (NUM_FEATURES, HIDDEN), jnp.float32, -bound1, bound1)
    b1 = jax.random.uniform(kb1, (HIDDEN,), jnp.float32, -bound1, bound1)
    bound2 = 1.0 / jnp.sqrt(jnp.float32(HIDDEN))
    w2 = jax.random.uniform(kw2, (HIDDEN, 1), jnp.float32, -bound2, bound2)
    b2 = jax.random.uniform(kb2, (1,), jnp.float32, -bound2, bound2)

    out = pytorch_regression_forward(x, w1, b1, w2, b2, seed=1234)
    jax.block_until_ready(out)
    assert out.shape == (B, 1) and out.dtype == jnp.float32
    assert bool(jnp.all(jnp.isfinite(out)))

    ref = _reference_forward(x, w1, b1, w2, b2, seed=1234)
    assert bool(jnp.allclose(out, ref, atol=2e-2, rtol=2e-2))
    print("KERNEL_OK")
</pallas_src>

<mosaic_0001>
module attributes {stable_mosaic.version = 11 : i64} {
  func.func @_regression_kernel(%arg0: i32, %arg1: memref<1xi32, #tpu.memory_space<smem>>, %arg2: memref<32x8xbf16, #tpu.memory_space<vmem>>, %arg3: memref<128x32xbf16, #tpu.memory_space<vmem>>, %arg4: memref<128x1xf32, #tpu.memory_space<vmem>>, %arg5: memref<128x1xf32, #tpu.memory_space<vmem>>, %arg6: memref<1x1xf32, #tpu.memory_space<vmem>>, %arg7: memref<1x8xf32, #tpu.memory_space<vmem>>) attributes {dimension_semantics = [#tpu.dimension_semantics<parallel>], iteration_bounds = array<i64: 1>, scalar_prefetch = 1 : i64, scratch_operands = 0 : i64, tpu.core_type = #tpu.core_type<tc>, window_params = [{transform_indices = @transform_0, window_bounds = array<i64: 32, 8>}, {pipeline_mode = #tpu.pipeline_mode<synchronous>, transform_indices = @transform_1, window_bounds = array<i64: 128, 32>}, {pipeline_mode = #tpu.pipeline_mode<synchronous>, transform_indices = @transform_2, window_bounds = array<i64: 128, 1>}, {pipeline_mode = #tpu.pipeline_mode<synchronous>, transform_indices = @transform_3, window_bounds = array<i64: 128, 1>}, {pipeline_mode = #tpu.pipeline_mode<synchronous>, transform_indices = @transform_4, window_bounds = array<i64: 1, 1>}, {transform_indices = @transform_5, window_bounds = array<i64: 1, 8>}]} {
    %c0 = arith.constant 0 : index
    %c0_0 = arith.constant 0 : index
    %0 = vector.load %arg3[%c0, %c0_0] : memref<128x32xbf16, #tpu.memory_space<vmem>>, vector<128x32xbf16>
    %c0_1 = arith.constant 0 : index
    %c0_2 = arith.constant 0 : index
    %1 = vector.load %arg2[%c0_1, %c0_2] : memref<32x8xbf16, #tpu.memory_space<vmem>>, vector<32x8xbf16>
    %cst = arith.constant dense<0.000000e+00> : vector<128x8xf32>
    %2 = tpu.matmul %0, %1, %cst {dimension_numbers = #tpu.dot_dimension_numbers<[1], [0], [0], [1], [0, 0, 1, 1], [], []>} : vector<128x32xbf16>, vector<32x8xbf16>, vector<128x8xf32> -> vector<128x8xf32>
    %c0_3 = arith.constant 0 : index
    %c0_4 = arith.constant 0 : index
    %3 = vector.load %arg4[%c0_3, %c0_4] : memref<128x1xf32, #tpu.memory_space<vmem>>, vector<128x1xf32>
    %4 = vector.broadcast %3 : vector<128x1xf32> to vector<128x8xf32>
    %5 = arith.addf %2, %4 : vector<128x8xf32>
    %cst_5 = arith.constant 0.000000e+00 : f32
    %6 = vector.broadcast %cst_5 : f32 to vector<128x8xf32>
    %7 = arith.maximumf %5, %6 : vector<128x8xf32>
    %c8_i32 = arith.constant 8 : i32
    %8 = arith.muli %arg0, %c8_i32 : i32
    %c0_6 = arith.constant 0 : index
    %9 = memref.load %arg1[%c0_6] : memref<1xi32, #tpu.memory_space<smem>>
    %10 = tpu.iota {dimensions = array<i32: 0>} : vector<128x8xi32>
    %11 = tpu.iota {dimensions = array<i32: 1>} : vector<128x8xi32>
    %12 = vector.broadcast %8 : i32 to vector<128x8xi32>
    %13 = arith.addi %11, %12 : vector<128x8xi32>
    %c128_i32 = arith.constant 128 : i32
    %14 = vector.broadcast %c128_i32 : i32 to vector<128x8xi32>
    %15 = arith.muli %13, %14 : vector<128x8xi32>
    %16 = arith.addi %15, %10 : vector<128x8xi32>
    %17 = vector.broadcast %9 : i32 to vector<128x8xi32>
    %18 = arith.addi %16, %17 : vector<128x8xi32>
    %c16_i32 = arith.constant 16 : i32
    %19 = vector.broadcast %c16_i32 : i32 to vector<128x8xi32>
    %20 = arith.shrui %18, %19 : vector<128x8xi32>
    %21 = arith.xori %18, %20 : vector<128x8xi32>
    %c-2048144789_i32 = arith.constant -2048144789 : i32
    %22 = vector.broadcast %c-2048144789_i32 : i32 to vector<128x8xi32>
    %23 = arith.muli %21, %22 : vector<128x8xi32>
    %c13_i32 = arith.constant 13 : i32
    %24 = vector.broadcast %c13_i32 : i32 to vector<128x8xi32>
    %25 = arith.shrui %23, %24 : vector<128x8xi32>
    %26 = arith.xori %23, %25 : vector<128x8xi32>
    %c-1028477387_i32 = arith.constant -1028477387 : i32
    %27 = vector.broadcast %c-1028477387_i32 : i32 to vector<128x8xi32>
    %28 = arith.muli %26, %27 : vector<128x8xi32>
    %c16_i32_7 = arith.constant 16 : i32
    %29 = vector.broadcast %c16_i32_7 : i32 to vector<128x8xi32>
    %30 = arith.shrui %28, %29 : vector<128x8xi32>
    %31 = arith.xori %28, %30 : vector<128x8xi32>
    %c-2147483648_i32 = arith.constant -2147483648 : i32
    %32 = vector.broadcast %c-2147483648_i32 : i32 to vector<128x8xi32>
    %33 = arith.andi %31, %32 : vector<128x8xi32>
    %c0_i32 = arith.constant 0 : i32
    %34 = vector.broadcast %c0_i32 : i32 to vector<128x8xi32>
    %35 = arith.cmpi ne, %33, %34 : vector<128x8xi32>
    %cst_8 = arith.constant 2.000000e+00 : f32
    %36 = vector.broadcast %cst_8 : f32 to vector<128x8xf32>
    %37 = arith.mulf %7, %36 : vector<128x8xf32>
    %cst_9 = arith.constant 0.000000e+00 : f32
    %38 = vector.broadcast %cst_9 : f32 to vector<128x8xf32>
    %39 = arith.select %35, %37, %38 : vector<128x8xi1>, vector<128x8xf32>
    %c0_10 = arith.constant 0 : index
    %c0_11 = arith.constant 0 : index
    %40 = vector.load %arg5[%c0_10, %c0_11] : memref<128x1xf32, #tpu.memory_space<vmem>>, vector<128x1xf32>
    %41 = vector.broadcast %40 : vector<128x1xf32> to vector<128x8xf32>
    %42 = arith.mulf %39, %41 : vector<128x8xf32>
    %cst_12 = arith.constant dense<0.000000e+00> : vector<8xf32>
    %43 = vector.multi_reduction <add>, %42, %cst_12 [0] : vector<128x8xf32> to vector<8xf32>
    %44 = vector.shape_cast %43 : vector<8xf32> to vector<1x8xf32>
    %c0_13 = arith.constant 0 : index
    %c0_14 = arith.constant 0 : index
    %45 = vector.load %arg6[%c0_13, %c0_14] : memref<1x1xf32, #tpu.memory_space<vmem>>, vector<1x1xf32>
    %46 = vector.broadcast %45 : vector<1x1xf32> to vector<1x8xf32>
    %47 = arith.addf %44, %46 : vector<1x8xf32>
    %c0_15 = arith.constant 0 : index
    %c0_16 = arith.constant 0 : index
    %48 = vector.load %arg7[%c0_15, %c0_16] : memref<1x8xf32, #tpu.memory_space<vmem>>, vector<1x8xf32>
    tpu.vector_store %arg7[%c0_15, %c0_16], %47 {strides = array<i32>} : memref<1x8xf32, #tpu.memory_space<vmem>>, vector<1x8xf32>,
    return
  }
  func.func @transform_0(%arg0: i32, %arg1: memref<1xi32, #tpu.memory_space<smem>>) -> (i32, i32) {
    %c0_i32 = arith.constant 0 : i32
    %c0_i32_0 = arith.constant 0 : i32
    return %c0_i32, %arg0 : i32, i32
  }
  func.func @transform_1(%arg0: i32, %arg1: memref<1xi32, #tpu.memory_space<smem>>) -> (i32, i32) {
    %c0_i32 = arith.constant 0 : i32
    %c0_i32_0 = arith.constant 0 : i32
    %c0_i32_1 = arith.constant 0 : i32
    return %c0_i32, %c0_i32_0 : i32, i32
  }
  func.func @transform_2(%arg0: i32, %arg1: memref<1xi32, #tpu.memory_space<smem>>) -> (i32, i32) {
    %c0_i32 = arith.constant 0 : i32
    %c0_i32_0 = arith.constant 0 : i32
    %c0_i32_1 = arith.constant 0 : i32
    return %c0_i32, %c0_i32_0 : i32, i32
  }
  func.func @transform_3(%arg0: i32, %arg1: memref<1xi32, #tpu.memory_space<smem>>) -> (i32, i32) {
    %c0_i32 = arith.constant 0 : i32
    %c0_i32_0 = arith.constant 0 : i32
    %c0_i32_1 = arith.constant 0 : i32
    return %c0_i32, %c0_i32_0 : i32, i32
  }
  func.func @transform_4(%arg0: i32, %arg1: memref<1xi32, #tpu.memory_space<smem>>) -> (i32, i32) {
    %c0_i32 = arith.constant 0 : i32
    %c0_i32_0 = arith.constant 0 : i32
    %c0_i32_1 = arith.constant 0 : i32
    return %c0_i32, %c0_i32_0 : i32, i32
  }
  func.func @transform_5(%arg0: i32, %arg1: memref<1xi32, #tpu.memory_space<smem>>) -> (i32, i32) {
    %c0_i32 = arith.constant 0 : i32
    %c0_i32_0 = arith.constant 0 : i32
    return %c0_i32, %arg0 : i32, i32
  }
}

</mosaic_0001>

<llo_original>
// kernel: tpu_custom_call.1
$region0: #{tpu_custom_call.1}
  #allocation0 [shape = 'u32[]', space=smem, size = 0x4, offset = 0x4, fixed_abs, tag = 'smem constant byte address 0x4 - core index']
  #allocation1 [shape = 'u32[144,128]{1,0:T(1,128)}', space=vmem, size = 0x12000, scoped, tag = 'internal scratch']
  #allocation2 [shape = 's32[1]{0}', space=sflag, size = 0x4, scoped, tag = 'scoped memory for tpu_custom_call.1']
  #allocation3 [shape = 's32[1]{0:T(128)S(6)}', space=smem, size = 0x200, scoped, tag = 'prefetched SMEM operand 0']
  #allocation4 [shape = 'f32[1,1]{1,0:T(1,128)S(1)}', space=vmem, size = 0x200, scoped, tag = 'scoped memory for tpu_custom_call.1']
  %s0 = inlined_call_operand.<no memory space> [shape: s32[1], index: 0, kind: input, shape index: {}]
  %s1 = inlined_call_operand.vmem [shape: bf16[32,8], index: 1, kind: input, shape index: {}]
  %s2 = inlined_call_operand.vmem [shape: bf16[128,32], index: 2, kind: input, shape index: {}]
  %s3 = inlined_call_operand.vmem [shape: f32[128,1], index: 3, kind: input, shape index: {}]
  %s4 = inlined_call_operand.vmem [shape: f32[128,1], index: 4, kind: input, shape index: {}]
  %s5 = inlined_call_operand.<no memory space> [shape: f32[1,1], index: 5, kind: input, shape index: {}]
  %s6 = inlined_call_operand.hbm [shape: f32[1,8], index: 6, kind: output, shape index: {}]
  %s7 = sld [smem:[#allocation0]]
  $region30: #{tpu_custom_call.1} parent=0
    _
  %s9 = ssub.s32 1, %s7
  %s10 = scalar_select 0, %s9, %s7
  %11 = sst [smem:[#allocation3]] %s0
  %v12 = vstv %s5
  %13 = vst [vmem:[#allocation4] sm:$0x1] %v12
  $region1: #{tpu_custom_call.1} parent=0
    #allocation5 [shape = 'u8[512]{0}', space=vmem, size = 0x400, scoped, tag = 'output window, operand 0, single buffered']
    #allocation6 [shape = 's32[1]{0}', space=sflag, size = 0x4, scoped, tag = 'scoped memory for tpu_custom_call.1']
    %14 = vsyncpa [#allocation6], 0
    // Predicated region
    $region2: #{tpu_custom_call.1} parent=1 // pred_check
      _
    $region3: #{tpu_custom_call.1} parent=1 // pred_check_branch
      %16 = sbr.rel (0) target = $region5
    $region4: #{tpu_custom_call.1} parent=1 // pred_region
      _
    $region5: #{tpu_custom_call.1} parent=1 // pred_fallthru
      _
    // Predicated region
    $region6: #{tpu_custom_call.1} parent=1 // pred_check
      _
    $region7: #{tpu_custom_call.1} parent=1 // pred_check_branch
      %18 = sbr.rel (0) target = $region9
    $region8: #{tpu_custom_call.1} parent=1 // pred_region
      _
    $region9: #{tpu_custom_call.1} parent=1 // pred_fallthru
      _
    // Predicated region
    $region10: #{tpu_custom_call.1} parent=1 // pred_check
      _
    $region11: #{tpu_custom_call.1} parent=1 // pred_check_branch
      %20 = sbr.rel (0) target = $region13
    $region12: #{tpu_custom_call.1} parent=1 // pred_region
      _
    $region13: #{tpu_custom_call.1} parent=1 // pred_fallthru
      _
    // Predicated region
    $region14: #{tpu_custom_call.1} parent=1 // pred_check
      _
    $region15: #{tpu_custom_call.1} parent=1 // pred_check_branch
      %22 = sbr.rel (0) target = $region17
    $region16: #{tpu_custom_call.1} parent=1 // pred_region
      _
    $region17: #{tpu_custom_call.1} parent=1 // pred_fallthru
      _
    // Predicated region
    $region18: #{tpu_custom_call.1} parent=1 // pred_check
      _
    $region19: #{tpu_custom_call.1} parent=1 // pred_check_branch
      %24 = sbr.rel (0) target = $region21
    $region20: #{tpu_custom_call.1} parent=1 // pred_region
      _
    $region21: #{tpu_custom_call.1} parent=1 // pred_fallthru
      _
    %v26 = vld [vmem:[%s2] sm:$0xf]
    %v27 = vld [vmem:[%s2 + $0x4] sm:$0xf]
    %v28 = vld [vmem:[%s2 + $0x8] sm:$0xf]
    %v29 = vld [vmem:[%s2 + $0xc] sm:$0xf]
    %v30 = vld [vmem:[%s2 + $0x10] sm:$0xf]
    %v31 = vld [vmem:[%s2 + $0x14] sm:$0xf]
    %v32 = vld [vmem:[%s2 + $0x18] sm:$0xf]
    %v33 = vld [vmem:[%s2 + $0x1c] sm:$0xf]
    %v34 = vld [vmem:[%s2 + $0x20] sm:$0xf]
    %v35 = vld [vmem:[%s2 + $0x24] sm:$0xf]
    %v36 = vld [vmem:[%s2 + $0x28] sm:$0xf]
    %v37 = vld [vmem:[%s2 + $0x2c] sm:$0xf]
    %v38 = vld [vmem:[%s2 + $0x30] sm:$0xf]
    %v39 = vld [vmem:[%s2 + $0x34] sm:$0xf]
    %v40 = vld [vmem:[%s2 + $0x38] sm:$0xf]
    %v41 = vld [vmem:[%s2 + $0x3c] sm:$0xf]
    %v42 = vld [vmem:[%s1] sm:$0xf]
    %v43 = vld [vmem:[%s1 + $0x4] sm:$0xf]
    %v44 = vld [vmem:[%s1 + $0x8] sm:$0xf]
    %v45 = vld [vmem:[%s1 + $0xc] sm:$0xf]
    %v46 = vld [vmem:[%s3] sm:$0xff]
    %v47 = vld [vmem:[%s3 + $0x8] sm:$0xff]
    %v48 = vld [vmem:[%s3 + $0x10] sm:$0xff]
    %v49 = vld [vmem:[%s3 + $0x18] sm:$0xff]
    %v50 = vld [vmem:[%s3 + $0x20] sm:$0xff]
    %v51 = vld [vmem:[%s3 + $0x28] sm:$0xff]
    %v52 = vld [vmem:[%s3 + $0x30] sm:$0xff]
    %v53 = vld [vmem:[%s3 + $0x38] sm:$0xff]
    %v54 = vld [vmem:[%s3 + $0x40] sm:$0xff]
    %v55 = vld [vmem:[%s3 + $0x48] sm:$0xff]
    %v56 = vld [vmem:[%s3 + $0x50] sm:$0xff]
    %v57 = vld [vmem:[%s3 + $0x58] sm:$0xff]
    %v58 = vld [vmem:[%s3 + $0x60] sm:$0xff]
    %v59 = vld [vmem:[%s3 + $0x68] sm:$0xff]
    %v60 = vld [vmem:[%s3 + $0x70] sm:$0xff]
    %v61 = vld [vmem:[%s3 + $0x78] sm:$0xff]
    %63 = vset.pattern.permute.xlu0 0
    %64 = vperm.xlu0 %63, %v46
    %v65 = vpop.permute.xlu0 %64
    %68 = vset.pattern.permute.xlu0 0
    %69 = vperm.xlu0 %68, %v47
    %v70 = vpop.permute.xlu0 %69
    %73 = vset.pattern.permute.xlu0 0
    %74 = vperm.xlu0 %73, %v48
    %v75 = vpop.permute.xlu0 %74
    %78 = vset.pattern.permute.xlu0 0
    %79 = vperm.xlu0 %78, %v49
    %v80 = vpop.permute.xlu0 %79
    %83 = vset.pattern.permute.xlu0 0
    %84 = vperm.xlu0 %83, %v50
    %v85 = vpop.permute.xlu0 %84
    %88 = vset.pattern.permute.xlu0 0
    %89 = vperm.xlu0 %88, %v51
    %v90 = vpop.permute.xlu0 %89
    %93 = vset.pattern.permute.xlu0 0
    %94 = vperm.xlu0 %93, %v52
    %v95 = vpop.permute.xlu0 %94
    %98 = vset.pattern.permute.xlu0 0
    %99 = vperm.xlu0 %98, %v53
    %v100 = vpop.permute.xlu0 %99
    %103 = vset.pattern.permute.xlu0 0
    %104 = vperm.xlu0 %103, %v54
    %v105 = vpop.permute.xlu0 %104
    %108 = vset.pattern.permute.xlu0 0
    %109 = vperm.xlu0 %108, %v55
    %v110 = vpop.permute.xlu0 %109
    %113 = vset.pattern.permute.xlu0 0
    %114 = vperm.xlu0 %113, %v56
    %v115 = vpop.permute.xlu0 %114
    %118 = vset.pattern.permute.xlu0 0
    %119 = vperm.xlu0 %118, %v57
    %v120 = vpop.permute.xlu0 %119
    %123 = vset.pattern.permute.xlu0 0
    %124 = vperm.xlu0 %123, %v58
    %v125 = vpop.permute.xlu0 %124
    %128 = vset.pattern.permute.xlu0 0
    %129 = vperm.xlu0 %128, %v59
    %v130 = vpop.permute.xlu0 %129
    %133 = vset.pattern.permute.xlu0 0
    %134 = vperm.xlu0 %133, %v60
    %v135 = vpop.permute.xlu0 %134
    %138 = vset.pattern.permute.xlu0 0
    %139 = vperm.xlu0 %138, %v61
    %v140 = vpop.permute.xlu0 %139
    %v158 = vunpack.c.l.b16 %v26
    %v159 = vunpack.c.l.b16 %v27
    %v160 = vunpack.c.l.b16 %v28
    %v161 = vunpack.c.l.b16 %v29
    %v162 = vunpack.c.l.b16 %v30
    %v163 = vunpack.c.l.b16 %v31
    %v164 = vunpack.c.l.b16 %v32
    %v165 = vunpack.c.l.b16 %v33
    %v166 = vunpack.c.l.b16 %v34
    %v167 = vunpack.c.l.b16 %v35
    %v168 = vunpack.c.l.b16 %v36
    %v169 = vunpack.c.l.b16 %v37
    %v170 = vunpack.c.l.b16 %v38
    %v171 = vunpack.c.l.b16 %v39
    %v172 = vunpack.c.l.b16 %v40
    %v173 = vunpack.c.l.b16 %v41
    %v174 = vpack.c.b16 %v159, %v158
    %v175 = vpack.c.b16 %v161, %v160
    %v176 = vpack.c.b16 %v163, %v162
    %v177 = vpack.c.b16 %v165, %v164
    %v178 = vpack.c.b16 %v167, %v166
    %v179 = vpack.c.b16 %v169, %v168
    %v180 = vpack.c.b16 %v171, %v170
    %v181 = vpack.c.b16 %v173, %v172
    %v186 = vunpack.c.l.b16 %v42
    %v187 = vunpack.c.l.b16 %v43
    %v188 = vunpack.c.l.b16 %v44
    %v189 = vunpack.c.l.b16 %v45
    %v190 = vpack.c.b16 %v187, %v186
    %v191 = vpack.c.b16 %v189, %v188
    %vm194 = vcmask 261120
    %v196 = vsel %vm194, %v174, 0
    %v199 = vsel %vm194, %v175, 0
    %v202 = vsel %vm194, %v176, 0
    %v205 = vsel %vm194, %v177, 0
    %v208 = vsel %vm194, %v178, 0
    %v211 = vsel %vm194, %v179, 0
    %v214 = vsel %vm194, %v180, 0
    %v217 = vsel %vm194, %v181, 0
    %219 = vmatprep.subr.bf16.mxu0 0
    %220 = vmatpush1.bf16.msra.mxu0 %v190
    %221 = vmatprep.subr.bf16.mxu0 0
    %222 = vmatpush1.bf16.msra.mxu0 %v191
    %223 = vmatprep.subr.bf16.mxu0 0
    %224 = vmatpush1.bf16.msra.mxu0 0
    %225 = vmatprep.subr.bf16.mxu0 0
    %226 = vmatpush1.bf16.msra.mxu0 0
    %227 = vmatprep.subr.bf16.mxu0 0
    %228 = vmatpush1.bf16.msra.mxu0 0
    %229 = vmatprep.subr.bf16.mxu0 0
    %230 = vmatpush1.bf16.msra.mxu0 0
    %231 = vmatprep.subr.bf16.mxu0 0
    %232 = vmatpush1.bf16.msra.mxu0 0
    %233 = vmatprep.subr.bf16.mxu0 0
    %234 = vmatpush1.bf16.msra.mxu0 0
    %235 = vmatprep.subr.bf16.mxu0 0
    %236 = vmatpush1.bf16.msra.mxu0 0
    %237 = vmatprep.subr.bf16.mxu0 0
    %238 = vmatpush1.bf16.msra.mxu0 0
    %239 = vmatprep.subr.bf16.mxu0 0
    %240 = vmatpush1.bf16.msra.mxu0 0
    %241 = vmatprep.subr.bf16.mxu0 0
    %242 = vmatpush1.bf16.msra.mxu0 0
    %243 = vmatprep.subr.bf16.mxu0 0
    %244 = vmatpush1.bf16.msra.mxu0 0
    %245 = vmatprep.subr.bf16.mxu0 0
    %246 = vmatpush1.bf16.msra.mxu0 0
    %247 = vmatprep.subr.bf16.mxu0 0
    %248 = vmatpush1.bf16.msra.mxu0 0
    %249 = vmatprep.subr.bf16.mxu0 0
    %250 = vmatpush1.bf16.msra.mxu0 0
    %251 = vmatprep.mubr.bf16.mxu0 0
    %252 = vmatmul.mubr.bf16.gmra.mrb[0].mxu0 %v196
    %v253 = vpop.f32.mrb[0].mxu0
    %v254 = vadd.f32 %v65, %v253
    %v255 = vpop.f32.mrb[0].mxu0
    %v256 = vpop.f32.mrb[0].mxu0
    %v257 = vadd.f32 %v70, %v256
    %v258 = vpop.f32.mrb[0].mxu0
    %259 = vmatprep.mubr.bf16.mxu0 0
    %260 = vmatmul.mubr.bf16.gmra.mrb[0].mxu0 %v199
    %v261 = vpop.f32.mrb[0].mxu0
    %v262 = vadd.f32 %v75, %v261
    %v263 = vpop.f32.mrb[0].mxu0
    %v264 = vpop.f32.mrb[0].mxu0
    %v265 = vadd.f32 %v80, %v264
    %v266 = vpop.f32.mrb[0].mxu0
    %267 = vmatprep.mubr.bf16.mxu0 0
    %268 = vmatmul.mubr.bf16.gmra.mrb[0].mxu0 %v202
    %v269 = vpop.f32.mrb[0].mxu0
    %v270 = vadd.f32 %v85, %v269
    %v271 = vpop.f32.mrb[0].mxu0
    %v272 = vpop.f32.mrb[0].mxu0
    %v273 = vadd.f32 %v90, %v272
    %v274 = vpop.f32.mrb[0].mxu0
    %275 = vmatprep.mubr.bf16.mxu0 0
    %276 = vmatmul.mubr.bf16.gmra.mrb[0].mxu0 %v205
    %v277 = vpop.f32.mrb[0].mxu0
    %v278 = vadd.f32 %v95, %v277
    %v279 = vpop.f32.mrb[0].mxu0
    %v280 = vpop.f32.mrb[0].mxu0
    %v281 = vadd.f32 %v100, %v280
    %v282 = vpop.f32.mrb[0].mxu0
    %283 = vmatprep.mubr.bf16.mxu0 0
    %284 = vmatmul.mubr.bf16.gmra.mrb[0].mxu0 %v208
    %v285 = vpop.f32.mrb[0].mxu0
    %v286 = vadd.f32 %v105, %v285
    %v287 = vpop.f32.mrb[0].mxu0
    %v288 = vpop.f32.mrb[0].mxu0
    %v289 = vadd.f32 %v110, %v288
    %v290 = vpop.f32.mrb[0].mxu0
    %291 = vmatprep.mubr.bf16.mxu0 0
    %292 = vmatmul.mubr.bf16.gmra.mrb[0].mxu0 %v211
    %v293 = vpop.f32.mrb[0].mxu0
    %v294 = vadd.f32 %v115, %v293
    %v295 = vpop.f32.mrb[0].mxu0
    %v296 = vpop.f32.mrb[0].mxu0
    %v297 = vadd.f32 %v120, %v296
    %v298 = vpop.f32.mrb[0].mxu0
    %299 = vmatprep.mubr.bf16.mxu0 0
    %300 = vmatmul.mubr.bf16.gmra.mrb[0].mxu0 %v214
    %v301 = vpop.f32.mrb[0].mxu0
    %v302 = vadd.f32 %v125, %v301
    %v303 = vpop.f32.mrb[0].mxu0
    %v304 = vpop.f32.mrb[0].mxu0
    %v305 = vadd.f32 %v130, %v304
    %v306 = vpop.f32.mrb[0].mxu0
    %307 = vmatprep.mubr.bf16.mxu0 0
    %308 = vmatmul.mubr.bf16.gmra.mrb[0].mxu0 %v217
    %v309 = vpop.f32.mrb[0].mxu0
    %v310 = vadd.f32 %v135, %v309
    %v311 = vpop.f32.mrb[0].mxu0
    %v312 = vpop.f32.mrb[0].mxu0
    %v313 = vadd.f32 %v140, %v312
    %v314 = vpop.f32.mrb[0].mxu0
    %315 = vdwg.mxu0
    %v316 = vmax.f32 %v254, 0.0
    %v317 = vmax.f32 %v257, 0.0
    %v318 = vmax.f32 %v262, 0.0
    %v319 = vmax.f32 %v265, 0.0
    %v320 = vmax.f32 %v270, 0.0
    %v321 = vmax.f32 %v273, 0.0
    %v322 = vmax.f32 %v278, 0.0
    %v323 = vmax.f32 %v281, 0.0
    %v324 = vmax.f32 %v286, 0.0
    %v325 = vmax.f32 %v289, 0.0
    %v326 = vmax.f32 %v294, 0.0
    %v327 = vmax.f32 %v297, 0.0
    %v328 = vmax.f32 %v302, 0.0
    %v329 = vmax.f32 %v305, 0.0
    %v330 = vmax.f32 %v310, 0.0
    %v331 = vmax.f32 %v313, 0.0
    %s332 = smul.u32 0, 8
    %s333 = sld [smem:[#allocation3]]
    %v334 = vlaneseq
    %v335 = vshrl.u32 %v334, 7
    %v336 = vadd.s32 %v335, 8
    %v337 = vadd.s32 %v335, 16
    %v338 = vadd.s32 %v335, 24
    %v339 = vadd.s32 %v335, 32
    %v340 = vadd.s32 %v335, 40
    %v341 = vadd.s32 %v335, 48
    %v342 = vadd.s32 %v335, 56
    %v343 = vadd.s32 %v335, 64
    %v344 = vadd.s32 %v335, 72
    %v345 = vadd.s32 %v335, 80
    %v346 = vadd.s32 %v335, 88
    %v347 = vadd.s32 %v335, 96
    %v348 = vadd.s32 %v335, 104
    %v349 = vadd.s32 %v335, 112
    %v350 = vadd.s32 %v335, 120
    %v351 = vlaneseq
    %v352 = vand.u32 %v351, 127
    %v353 = vstv %s332
    %v354 = vadd.s32 %v352, %v353
    %v355 = vmul.u32 %v354, 128
    %v356 = vadd.s32 %v355, %v335
    %v357 = vadd.s32 %v355, %v336
    %v358 = vadd.s32 %v355, %v337
    %v359 = vadd.s32 %v355, %v338
    %v360 = vadd.s32 %v355, %v339
    %v361 = vadd.s32 %v355, %v340
    %v362 = vadd.s32 %v355, %v341
    %v363 = vadd.s32 %v355, %v342
    %v364 = vadd.s32 %v355, %v343
    %v365 = vadd.s32 %v355, %v344
    %v366 = vadd.s32 %v355, %v345
    %v367 = vadd.s32 %v355, %v346
    %v368 = vadd.s32 %v355, %v347
    %v369 = vadd.s32 %v355, %v348
    %v370 = vadd.s32 %v355, %v349
    %v371 = vadd.s32 %v355, %v350
    %v372 = vstv %s333
    %v373 = vadd.s32 %v356, %v372
    %v374 = vadd.s32 %v357, %v372
    %v375 = vadd.s32 %v358, %v372
    %v376 = vadd.s32 %v359, %v372
    %v377 = vadd.s32 %v360, %v372
    %v378 = vadd.s32 %v361, %v372
    %v379 = vadd.s32 %v362, %v372
    %v380 = vadd.s32 %v363, %v372
    %v381 = vadd.s32 %v364, %v372
    %v382 = vadd.s32 %v365, %v372
    %v383 = vadd.s32 %v366, %v372
    %v384 = vadd.s32 %v367, %v372
    %v385 = vadd.s32 %v368, %v372
    %v386 = vadd.s32 %v369, %v372
    %v387 = vadd.s32 %v370, %v372
    %v388 = vadd.s32 %v371, %v372
    %v389 = vshrl.u32 %v373, 16
    %v390 = vshrl.u32 %v374, 16
    %v391 = vshrl.u32 %v375, 16
    %v392 = vshrl.u32 %v376, 16
    %v393 = vshrl.u32 %v377, 16
    %v394 = vshrl.u32 %v378, 16
    %v395 = vshrl.u32 %v379, 16
    %v396 = vshrl.u32 %v380, 16
    %v397 = vshrl.u32 %v381, 16
    %v398 = vshrl.u32 %v382, 16
    %v399 = vshrl.u32 %v383, 16
    %v400 = vshrl.u32 %v384, 16
    %v401 = vshrl.u32 %v385, 16
    %v402 = vshrl.u32 %v386, 16
    %v403 = vshrl.u32 %v387, 16
    %v404 = vshrl.u32 %v388, 16
    %v405 = vxor.u32 %v373, %v389
    %v406 = vxor.u32 %v374, %v390
    %v407 = vxor.u32 %v375, %v391
    %v408 = vxor.u32 %v376, %v392
    %v409 = vxor.u32 %v377, %v393
    %v410 = vxor.u32 %v378, %v394
    %v411 = vxor.u32 %v379, %v395
    %v412 = vxor.u32 %v380, %v396
    %v413 = vxor.u32 %v381, %v397
    %v414 = vxor.u32 %v382, %v398
    %v415 = vxor.u32 %v383, %v399
    %v416 = vxor.u32 %v384, %v400
    %v417 = vxor.u32 %v385, %v401
    %v418 = vxor.u32 %v386, %v402
    %v419 = vxor.u32 %v387, %v403
    %v420 = vxor.u32 %v388, %v404
    %v421 = vmul.u32 %v405, 2246822507
    %v422 = vmul.u32 %v406, 2246822507
    %v423 = vmul.u32 %v407, 2246822507
    %v424 = vmul.u32 %v408, 2246822507
    %v425 = vmul.u32 %v409, 2246822507
    %v426 = vmul.u32 %v410, 2246822507
    %v427 = vmul.u32 %v411, 2246822507
    %v428 = vmul.u32 %v412, 2246822507
    %v429 = vmul.u32 %v413, 2246822507
    %v430 = vmul.u32 %v414, 2246822507
    %v431 = vmul.u32 %v415, 2246822507
    %v432 = vmul.u32 %v416, 2246822507
    %v433 = vmul.u32 %v417, 2246822507
    %v434 = vmul.u32 %v418, 2246822507
    %v435 = vmul.u32 %v419, 2246822507
    %v436 = vmul.u32 %v420, 2246822507
    %v437 = vshrl.u32 %v421, 13
    %v438 = vshrl.u32 %v422, 13
    %v439 = vshrl.u32 %v423, 13
    %v440 = vshrl.u32 %v424, 13
    %v441 = vshrl.u32 %v425, 13
    %v442 = vshrl.u32 %v426, 13
    %v443 = vshrl.u32 %v427, 13
    %v444 = vshrl.u32 %v428, 13
    %v445 = vshrl.u32 %v429, 13
    %v446 = vshrl.u32 %v430, 13
    %v447 = vshrl.u32 %v431, 13
    %v448 = vshrl.u32 %v432, 13
    %v449 = vshrl.u32 %v433, 13
    %v450 = vshrl.u32 %v434, 13
    %v451 = vshrl.u32 %v435, 13
    %v452 = vshrl.u32 %v436, 13
    %v453 = vxor.u32 %v421, %v437
    %v454 = vxor.u32 %v422, %v438
    %v455 = vxor.u32 %v423, %v439
    %v456 = vxor.u32 %v424, %v440
    %v457 = vxor.u32 %v425, %v441
    %v458 = vxor.u32 %v426, %v442
    %v459 = vxor.u32 %v427, %v443
    %v460 = vxor.u32 %v428, %v444
    %v461 = vxor.u32 %v429, %v445
    %v462 = vxor.u32 %v430, %v446
    %v463 = vxor.u32 %v431, %v447
    %v464 = vxor.u32 %v432, %v448
    %v465 = vxor.u32 %v433, %v449
    %v466 = vxor.u32 %v434, %v450
    %v467 = vxor.u32 %v435, %v451
    %v468 = vxor.u32 %v436, %v452
    %v469 = vmul.u32 %v453, 3266489909
    %v470 = vmul.u32 %v454, 3266489909
    %v471 = vmul.u32 %v455, 3266489909
    %v472 = vmul.u32 %v456, 3266489909
    %v473 = vmul.u32 %v457, 3266489909
    %v474 = vmul.u32 %v458, 3266489909
    %v475 = vmul.u32 %v459, 3266489909
    %v476 = vmul.u32 %v460, 3266489909
    %v477 = vmul.u32 %v461, 3266489909
    %v478 = vmul.u32 %v462, 3266489909
    %v479 = vmul.u32 %v463, 3266489909
    %v480 = vmul.u32 %v464, 3266489909
    %v481 = vmul.u32 %v465, 3266489909
    %v482 = vmul.u32 %v466, 3266489909
    %v483 = vmul.u32 %v467, 3266489909
    %v484 = vmul.u32 %v468, 3266489909
    %v485 = vshrl.u32 %v469, 16
    %v486 = vshrl.u32 %v470, 16
    %v487 = vshrl.u32 %v471, 16
    %v488 = vshrl.u32 %v472, 16
    %v489 = vshrl.u32 %v473, 16
    %v490 = vshrl.u32 %v474, 16
    %v491 = vshrl.u32 %v475, 16
    %v492 = vshrl.u32 %v476, 16
    %v493 = vshrl.u32 %v477, 16
    %v494 = vshrl.u32 %v478, 16
    %v495 = vshrl.u32 %v479, 16
    %v496 = vshrl.u32 %v480, 16
    %v497 = vshrl.u32 %v481, 16
    %v498 = vshrl.u32 %v482, 16
    %v499 = vshrl.u32 %v483, 16
    %v500 = vshrl.u32 %v484, 16
    %v501 = vxor.u32 %v469, %v485
    %v502 = vxor.u32 %v470, %v486
    %v503 = vxor.u32 %v471, %v487
    %v504 = vxor.u32 %v472, %v488
    %v505 = vxor.u32 %v473, %v489
    %v506 = vxor.u32 %v474, %v490
    %v507 = vxor.u32 %v475, %v491
    %v508 = vxor.u32 %v476, %v492
    %v509 = vxor.u32 %v477, %v493
    %v510 = vxor.u32 %v478, %v494
    %v511 = vxor.u32 %v479, %v495
    %v512 = vxor.u32 %v480, %v496
    %v513 = vxor.u32 %v481, %v497
    %v514 = vxor.u32 %v482, %v498
    %v515 = vxor.u32 %v483, %v499
    %v516 = vxor.u32 %v484, %v500
    %v517 = vand.u32 %v501, 2147483648
    %v518 = vand.u32 %v502, 2147483648
    %v519 = vand.u32 %v503, 2147483648
    %v520 = vand.u32 %v504, 2147483648
    %v521 = vand.u32 %v505, 2147483648
    %v522 = vand.u32 %v506, 2147483648
    %v523 = vand.u32 %v507, 2147483648
    %v524 = vand.u32 %v508, 2147483648
    %v525 = vand.u32 %v509, 2147483648
    %v526 = vand.u32 %v510, 2147483648
    %v527 = vand.u32 %v511, 2147483648
    %v528 = vand.u32 %v512, 2147483648
    %v529 = vand.u32 %v513, 2147483648
    %v530 = vand.u32 %v514, 2147483648
    %v531 = vand.u32 %v515, 2147483648
    %v532 = vand.u32 %v516, 2147483648
    %vm533 = vcmp.ne.s32.totalorder %v517, 0
    %vm534 = vcmp.ne.s32.totalorder %v518, 0
    %vm535 = vcmp.ne.s32.totalorder %v519, 0
    %vm536 = vcmp.ne.s32.totalorder %v520, 0
    %vm537 = vcmp.ne.s32.totalorder %v521, 0
    %vm538 = vcmp.ne.s32.totalorder %v522, 0
    %vm539 = vcmp.ne.s32.totalorder %v523, 0
    %vm540 = vcmp.ne.s32.totalorder %v524, 0
    %vm541 = vcmp.ne.s32.totalorder %v525, 0
    %vm542 = vcmp.ne.s32.totalorder %v526, 0
    %vm543 = vcmp.ne.s32.totalorder %v527, 0
    %vm544 = vcmp.ne.s32.totalorder %v528, 0
    %vm545 = vcmp.ne.s32.totalorder %v529, 0
    %vm546 = vcmp.ne.s32.totalorder %v530, 0
    %vm547 = vcmp.ne.s32.totalorder %v531, 0
    %vm548 = vcmp.ne.s32.totalorder %v532, 0
    %v549 = vmul.f32 %v316, 2.0
    %v550 = vmul.f32 %v317, 2.0
    %v551 = vmul.f32 %v318, 2.0
    %v552 = vmul.f32 %v319, 2.0
    %v553 = vmul.f32 %v320, 2.0
    %v554 = vmul.f32 %v321, 2.0
    %v555 = vmul.f32 %v322, 2.0
    %v556 = vmul.f32 %v323, 2.0
    %v557 = vmul.f32 %v324, 2.0
    %v558 = vmul.f32 %v325, 2.0
    %v559 = vmul.f32 %v326, 2.0
    %v560 = vmul.f32 %v327, 2.0
    %v561 = vmul.f32 %v328, 2.0
    %v562 = vmul.f32 %v329, 2.0
    %v563 = vmul.f32 %v330, 2.0
    %v564 = vmul.f32 %v331, 2.0
    %v565 = vsel %vm533, %v549, 0.0
    %v566 = vsel %vm534, %v550, 0.0
    %v567 = vsel %vm535, %v551, 0.0
    %v568 = vsel %vm536, %v552, 0.0
    %v569 = vsel %vm537, %v553, 0.0
    %v570 = vsel %vm538, %v554, 0.0
    %v571 = vsel %vm539, %v555, 0.0
    %v572 = vsel %vm540, %v556, 0.0
    %v573 = vsel %vm541, %v557, 0.0
    %v574 = vsel %vm542, %v558, 0.0
    %v575 = vsel %vm543, %v559, 0.0
    %v576 = vsel %vm544, %v560, 0.0
    %v577 = vsel %vm545, %v561, 0.0
    %v578 = vsel %vm546, %v562, 0.0
    %v579 = vsel %vm547, %v563, 0.0
    %v580 = vsel %vm548, %v564, 0.0
    %v581 = vld [vmem:[%s4] sm:$0xff]
    %v582 = vld [vmem:[%s4 + $0x8] sm:$0xff]
    %v583 = vld [vmem:[%s4 + $0x10] sm:$0xff]
    %v584 = vld [vmem:[%s4 + $0x18] sm:$0xff]
    %v585 = vld [vmem:[%s4 + $0x20] sm:$0xff]
    %v586 = vld [vmem:[%s4 + $0x28] sm:$0xff]
    %v587 = vld [vmem:[%s4 + $0x30] sm:$0xff]
    %v588 = vld [vmem:[%s4 + $0x38] sm:$0xff]
    %v589 = vld [vmem:[%s4 + $0x40] sm:$0xff]
    %v590 = vld [vmem:[%s4 + $0x48] sm:$0xff]
    %v591 = vld [vmem:[%s4 + $0x50] sm:$0xff]
    %v592 = vld [vmem:[%s4 + $0x58] sm:$0xff]
    %v593 = vld [vmem:[%s4 + $0x60] sm:$0xff]
    %v594 = vld [vmem:[%s4 + $0x68] sm:$0xff]
    %v595 = vld [vmem:[%s4 + $0x70] sm:$0xff]
    %v596 = vld [vmem:[%s4 + $0x78] sm:$0xff]
    %598 = vset.pattern.permute.xlu0 0
    %599 = vperm.xlu0 %598, %v581
    %v600 = vpop.permute.xlu0 %599
    %603 = vset.pattern.permute.xlu0 0
    %604 = vperm.xlu0 %603, %v582
    %v605 = vpop.permute.xlu0 %604
    %608 = vset.pattern.permute.xlu0 0
    %609 = vperm.xlu0 %608, %v583
    %v610 = vpop.permute.xlu0 %609
    %613 = vset.pattern.permute.xlu0 0
    %614 = vperm.xlu0 %613, %v584
    %v615 = vpop.permute.xlu0 %614
    %618 = vset.pattern.permute.xlu0 0
    %619 = vperm.xlu0 %618, %v585
    %v620 = vpop.permute.xlu0 %619
    %623 = vset.pattern.permute.xlu0 0
    %624 = vperm.xlu0 %623, %v586
    %v625 = vpop.permute.xlu0 %624
    %628 = vset.pattern.permute.xlu0 0
    %629 = vperm.xlu0 %628, %v587
    %v630 = vpop.permute.xlu0 %629
    %633 = vset.pattern.permute.xlu0 0
    %634 = vperm.xlu0 %633, %v588
    %v635 = vpop.permute.xlu0 %634
    %638 = vset.pattern.permute.xlu0 0
    %639 = vperm.xlu0 %638, %v589
    %v640 = vpop.permute.xlu0 %639
    %643 = vset.pattern.permute.xlu0 0
    %644 = vperm.xlu0 %643, %v590
    %v645 = vpop.permute.xlu0 %644
    %648 = vset.pattern.permute.xlu0 0
    %649 = vperm.xlu0 %648, %v591
    %v650 = vpop.permute.xlu0 %649
    %653 = vset.pattern.permute.xlu0 0
    %654 = vperm.xlu0 %653, %v592
    %v655 = vpop.permute.xlu0 %654
    %658 = vset.pattern.permute.xlu0 0
    %659 = vperm.xlu0 %658, %v593
    %v660 = vpop.permute.xlu0 %659
    %663 = vset.pattern.permute.xlu0 0
    %664 = vperm.xlu0 %663, %v594
    %v665 = vpop.permute.xlu0 %664
    %668 = vset.pattern.permute.xlu0 0
    %669 = vperm.xlu0 %668, %v595
    %v670 = vpop.permute.xlu0 %669
    %673 = vset.pattern.permute.xlu0 0
    %674 = vperm.xlu0 %673, %v596
    %v675 = vpop.permute.xlu0 %674
    %v677 = vmul.f32 %v565, %v600
    %v678 = vmul.f32 %v566, %v605
    %v679 = vmul.f32 %v567, %v610
    %v680 = vmul.f32 %v568, %v615
    %v681 = vmul.f32 %v569, %v620
    %v682 = vmul.f32 %v570, %v625
    %v683 = vmul.f32 %v571, %v630
    %v684 = vmul.f32 %v572, %v635
    %v685 = vmul.f32 %v573, %v640
    %v686 = vmul.f32 %v574, %v645
    %v687 = vmul.f32 %v575, %v650
    %v688 = vmul.f32 %v576, %v655
    %v689 = vmul.f32 %v577, %v660
    %v690 = vmul.f32 %v578, %v665
    %v691 = vmul.f32 %v579, %v670
    %v692 = vmul.f32 %v580, %v675
    %vm693 = vcmask 64512
    %v694 = vsel %vm693, %v677, 0.0
    %v695 = vsel %vm693, %v678, 0.0
    %v696 = vadd.f32 %v694, %v695
    %v697 = vsel %vm693, %v679, 0.0
    %v698 = vadd.f32 %v696, %v697
    %v699 = vsel %vm693, %v680, 0.0
    %v700 = vadd.f32 %v698, %v699
    %v701 = vsel %vm693, %v681, 0.0
    %v702 = vadd.f32 %v700, %v701
    %v703 = vsel %vm693, %v682, 0.0
    %v704 = vadd.f32 %v702, %v703
    %v705 = vsel %vm693, %v683, 0.0
    %v706 = vadd.f32 %v704, %v705
    %v707 = vsel %vm693, %v684, 0.0
    %v708 = vadd.f32 %v706, %v707
    %v709 = vsel %vm693, %v685, 0.0
    %v710 = vadd.f32 %v708, %v709
    %v711 = vsel %vm693, %v686, 0.0
    %v712 = vadd.f32 %v710, %v711
    %v713 = vsel %vm693, %v687, 0.0
    %v714 = vadd.f32 %v712, %v713
    %v715 = vsel %vm693, %v688, 0.0
    %v716 = vadd.f32 %v714, %v715
    %v717 = vsel %vm693, %v689, 0.0
    %v718 = vadd.f32 %v716, %v717
    %v719 = vsel %vm693, %v690, 0.0
    %v720 = vadd.f32 %v718, %v719
    %v721 = vsel %vm693, %v691, 0.0
    %v722 = vadd.f32 %v720, %v721
    %v723 = vsel %vm693, %v692, 0.0
    %v724 = vadd.f32 %v722, %v723
    %v725 = vrot.slane %v724, 4
    %v726 = vadd.f32 %v724, %v725
    %v727 = vrot.slane %v726, 2
    %v728 = vadd.f32 %v726, %v727
    %v729 = vrot.slane %v728, 1
    %v730 = vadd.f32 %v728, %v729
    %v731 = vld [vmem:[#allocation4] sm:$0x1]
    %733 = vset.pattern.permute.xlu0 0
    %734 = vperm.xlu0 %733, %v731
    %v735 = vpop.permute.xlu0 %734
    %v737 = vlaneseq
    %v738 = vshrl.u32 %v737, 7
    %v739 = vsub.s32 0, %v738
    %v740 = vrot.slane %v735, %v739
    %v741 = vadd.f32 %v730, %v740
    %vm742 = vcmask 57344
    %743 = vst.msk [vmem:[#allocation5] sm:$0x1] %vm742, %v741
    // Predicated region
    $region22: #{tpu_custom_call.1} parent=1 // pred_check
      _
    $region23: #{tpu_custom_call.1} parent=1 // pred_check_branch
      %745 = sbr.rel (0) target = $region25
    $region24: #{tpu_custom_call.1} parent=1 // pred_region
      %s747 = ssub.s32 16, 16
      %748 = vsyncadd [#allocation6], %s747
      %s750 = sshll.u32 [#allocation5], 4
      %s751 = int_to_ptr.vmem [resolvable:$true] %s750
      %753 = dma.vmem_to_hbm [thread:$0]  %s751, 16, %s6, [#allocation6]
    $region25: #{tpu_custom_call.1} parent=1 // pred_fallthru
      _
    // Predicated region
    $region26: #{tpu_custom_call.1} parent=1 // pred_check
      _
    $region27: #{tpu_custom_call.1} parent=1 // pred_check_branch
      %755 = sbr.rel (0) target = $region29
    $region28: #{tpu_custom_call.1} parent=1 // pred_region
      %756 = dma.done [#allocation6], 16
    $region29: #{tpu_custom_call.1} parent=1 // pred_fallthru
      _
    %757 = vsyncpa [#allocation6], 1

</llo_original>
